<compile_context>
chip_gen: v6e
topology: v6e:2x2x1
jax: 0.10.0
libtpu: 0.0.40
codegen_flags: <defaults>
</compile_context>

<pallas_src>
import functools
import math

import jax
import jax.numpy as jnp
from jax.experimental import pallas as pl
from jax.experimental.pallas import tpu as pltpu

_NEG_LOG_1E4 = -math.log(1e-4)  # 9.210340371976182


def _nce_rce_kernel(pred_ref, labels_ref, out_ref, acc_ref, *,
                    alpha, beta, n_valid):
    i = pl.program_id(0)

    @pl.when(i == 0)
    def _init():
        acc_ref[...] = jnp.zeros_like(acc_ref)

    logits = pred_ref[...].astype(jnp.float32)      # (TN, C)
    labels = labels_ref[...]                        # (TN, 1) int32
    tn, c = logits.shape

    # Mask rows that are padding (N was padded up to a multiple of the row tile).
    row_ids = i * tn + jax.lax.broadcasted_iota(jnp.int32, (tn, 1), 0)
    row_valid = row_ids < n_valid                   # (TN, 1) bool

    # Numerically stable softmax / log-softmax; exp over the tile evaluated once.
    m = jnp.max(logits, axis=1, keepdims=True)
    z = logits - m
    e = jnp.exp(z)
    sum_e = jnp.sum(e, axis=1, keepdims=True)
    logp = z - jnp.log(sum_e)                       # log_softmax
    p = e * (1.0 / sum_e)                           # softmax (reuses e)

    # Boolean one-hot via iota compare (no f32 one_hot tile materialized).
    class_ids = jax.lax.broadcasted_iota(jnp.int32, (tn, c), 1)
    is_label = class_ids == labels                  # (TN, C) bool

    # NormalizedCrossEntropy: -sum(one_hot * logp) / -sum(logp)
    num = -jnp.sum(jnp.where(is_label, logp, 0.0), axis=1, keepdims=True)
    den = -jnp.sum(logp, axis=1, keepdims=True)
    nce = num / den                                 # (TN, 1)

    # ReverseCrossEntropy: -sum(clip(p,1e-7,1) * log(clip(one_hot,1e-4,1)))
    # log(clip(one_hot)) is 0 at the label column and log(1e-4) elsewhere, so
    #   rce = -log(1e-4) * (sum(clip(p)) - clip(p)[label])   (exact identity)
    p_c = jnp.maximum(p, 1e-7)
    p_lab = jnp.sum(jnp.where(is_label, p_c, 0.0), axis=1, keepdims=True)
    p_sum = jnp.sum(p_c, axis=1, keepdims=True)
    rce = _NEG_LOG_1E4 * (p_sum - p_lab)            # (TN, 1)

    per_row = jnp.where(row_valid, alpha * nce + beta * rce, 0.0)
    acc_ref[...] = acc_ref[...] + jnp.sum(per_row)

    @pl.when(i == pl.num_programs(0) - 1)
    def _finalize():
        out_ref[...] = acc_ref[...] * (1.0 / n_valid)


def _round_up(x, m):
    return ((x + m - 1) // m) * m


def nce_and_rce(pred, labels, *, alpha, beta, num_classes, block_rows=None):
    """pred: (N, C) logits (any float dtype); labels: (N,) int32 ids -> scalar loss."""
    n, c = pred.shape
    assert c == num_classes
    labels2d = labels.reshape(n, 1).astype(jnp.int32)

    if block_rows is None:
        # Target ~2 MiB of f32 per row-tile: double-buffered inputs plus the
        # elementwise f32 temporaries stay well inside scoped VMEM on every
        # generation (v5e/v6e: 128 MiB physical, v7x: 64 MiB physical).
        tn = (2 * 1024 * 1024) // (4 * c)
        tn = max(8, min(1024, (tn // 8) * 8))
    else:
        tn = max(8, (block_rows // 8) * 8)
    tn = min(tn, _round_up(n, 8))

    n_pad = _round_up(n, tn)
    if n_pad != n:
        pred = jnp.pad(pred, ((0, n_pad - n), (0, 0)))
        labels2d = jnp.pad(labels2d, ((0, n_pad - n), (0, 0)))

    kernel = functools.partial(_nce_rce_kernel, alpha=float(alpha),
                               beta=float(beta), n_valid=n)

    in_bytes = n_pad * c * pred.dtype.itemsize + n_pad * 4
    cost = pl.CostEstimate(flops=12 * n_pad * c,
                           transcendentals=n_pad * (c + 2),
                           bytes_accessed=in_bytes + 4)

    out = pl.pallas_call(
        kernel,
        out_shape=jax.ShapeDtypeStruct((1, 1), jnp.float32),
        grid_spec=pltpu.PrefetchScalarGridSpec(
            num_scalar_prefetch=0,
            grid=(n_pad // tn,),
            in_specs=[
                pl.BlockSpec((tn, c), lambda i: (i, 0)),
                pl.BlockSpec((tn, 1), lambda i: (i, 0)),
            ],
            out_specs=pl.BlockSpec((1, 1), lambda i: (0, 0)),
            scratch_shapes=[pltpu.VMEM((1, 1), jnp.float32)],
        ),
        compiler_params=pltpu.CompilerParams(
            dimension_semantics=("arbitrary",),
            vmem_limit_bytes=48 * 1024 * 1024,
        ),
        cost_estimate=cost,
    )(pred, labels2d)
    # TODO(synk): optional megacore (2-TC) split on v7x via per-tile partial-sum
    # outputs combined in the wrapper; single "arbitrary" axis runs on one TC.
    return out[0, 0]


def _reference(pred, labels, alpha, beta, num_classes):
    pred = pred.astype(jnp.float32)
    logp = jax.nn.log_softmax(pred, axis=1)
    p = jax.nn.softmax(pred, axis=1)
    oh = jax.nn.one_hot(labels, num_classes, dtype=jnp.float32)
    nce = (-jnp.sum(oh * logp, axis=1) / -jnp.sum(logp, axis=1)).mean()
    rce = (-jnp.sum(jnp.clip(p, 1e-7, 1.0) *
                    jnp.log(jnp.clip(oh, 1e-4, 1.0)), axis=1)).mean()
    return alpha * nce + beta * rce


if __name__ == "__main__":
    key = jax.random.PRNGKey(0)
    k1, k2, k3, k4 = jax.random.split(key, 4)

    ALPHA, BETA = 1.0, 0.5

    # Case 1: small demo shape (single tile; C < 128 accepted for tiny C).
    N1, C1 = 8, 16
    pred1 = jax.random.normal(k1, (N1, C1), dtype=jnp.float32)
    lab1 = jax.random.randint(k2, (N1,), 0, C1, dtype=jnp.int32)
    loss1 = nce_and_rce(pred1, lab1, alpha=ALPHA, beta=BETA, num_classes=C1)
    jax.block_until_ready(loss1)
    ref1 = _reference(pred1, lab1, ALPHA, BETA, C1)
    assert jnp.allclose(loss1, ref1, rtol=1e-4, atol=1e-5), (loss1, ref1)

    # Case 2: multi-step grid with a masked remainder tile (N=40, row tile=16).
    N2, C2 = 40, 16
    pred2 = jax.random.normal(k3, (N2, C2), dtype=jnp.float32)
    lab2 = jax.random.randint(k4, (N2,), 0, C2, dtype=jnp.int32)
    loss2 = nce_and_rce(pred2, lab2, alpha=ALPHA, beta=BETA, num_classes=C2,
                        block_rows=16)
    jax.block_until_ready(loss2)
    ref2 = _reference(pred2, lab2, ALPHA, BETA, C2)
    assert jnp.allclose(loss2, ref2, rtol=1e-4, atol=1e-5), (loss2, ref2)

    print("KERNEL_OK")
</pallas_src>

<mosaic_0001>
module attributes {stable_mosaic.version = 11 : i64} {
  func.func @_nce_rce_kernel(%arg0: i32, %arg1: memref<8x16xf32, #tpu.memory_space<vmem>>, %arg2: memref<8x1xi32, #tpu.memory_space<vmem>>, %arg3: memref<1x1xf32, #tpu.memory_space<vmem>>, %arg4: memref<1x1xf32, #tpu.memory_space<vmem>>) attributes {dimension_semantics = [#tpu.dimension_semantics<arbitrary>], iteration_bounds = array<i64: 1>, scalar_prefetch = 0 : i64, scratch_operands = 1 : i64, tpu.core_type = #tpu.core_type<tc>, window_params = [{transform_indices = @transform_0, window_bounds = array<i64: 8, 16>}, {transform_indices = @transform_1, window_bounds = array<i64: 8, 1>}, {pipeline_mode = #tpu.pipeline_mode<synchronous>, transform_indices = @transform_2, window_bounds = array<i64: 1, 1>}]} {
    %c0_i32 = arith.constant 0 : i32
    %0 = arith.cmpi eq, %arg0, %c0_i32 : i32
    %1 = arith.extui %0 : i1 to i32
    %c0_i32_0 = arith.constant 0 : i32
    %2 = arith.cmpi ne, %1, %c0_i32_0 : i32
    scf.if %2 {
      %cst_27 = arith.constant 0.000000e+00 : f32
      %68 = vector.broadcast %cst_27 : f32 to vector<1x1xf32>
      %c0_28 = arith.constant 0 : index
      %c0_29 = arith.constant 0 : index
      %69 = vector.load %arg4[%c0_28, %c0_29] : memref<1x1xf32, #tpu.memory_space<vmem>>, vector<1x1xf32>
      tpu.vector_store %arg4[%c0_28, %c0_29], %68 {strides = array<i32>} : memref<1x1xf32, #tpu.memory_space<vmem>>, vector<1x1xf32>,
    } else {
    }
    %c0 = arith.constant 0 : index
    %c0_1 = arith.constant 0 : index
    %3 = vector.load %arg1[%c0, %c0_1] : memref<8x16xf32, #tpu.memory_space<vmem>>, vector<8x16xf32>
    %c0_2 = arith.constant 0 : index
    %c0_3 = arith.constant 0 : index
    %4 = vector.load %arg2[%c0_2, %c0_3] : memref<8x1xi32, #tpu.memory_space<vmem>>, vector<8x1xi32>
    %c8_i32 = arith.constant 8 : i32
    %5 = arith.muli %arg0, %c8_i32 : i32
    %6 = tpu.iota {dimensions = array<i32: 0>} : vector<8x1xi32>
    %7 = vector.broadcast %5 : i32 to vector<8x1xi32>
    %8 = arith.addi %7, %6 : vector<8x1xi32>
    %c8_i32_4 = arith.constant 8 : i32
    %9 = vector.broadcast %c8_i32_4 : i32 to vector<8x1xi32>
    %10 = arith.cmpi slt, %8, %9 : vector<8x1xi32>
    %cst = arith.constant dense<0xFF800000> : vector<8xf32>
    %11 = vector.multi_reduction <maximumf>, %3, %cst [1] : vector<8x16xf32> to vector<8xf32>
    %12 = vector.shape_cast %11 : vector<8xf32> to vector<8x1xf32>
    %13 = vector.broadcast %12 : vector<8x1xf32> to vector<8x16xf32>
    %14 = arith.subf %3, %13 : vector<8x16xf32>
    %15 = math.exp %14 : vector<8x16xf32>
    %cst_5 = arith.constant dense<0.000000e+00> : vector<8xf32>
    %16 = vector.multi_reduction <add>, %15, %cst_5 [1] : vector<8x16xf32> to vector<8xf32>
    %17 = vector.shape_cast %16 : vector<8xf32> to vector<8x1xf32>
    %18 = math.log %17 : vector<8x1xf32>
    %19 = vector.broadcast %18 : vector<8x1xf32> to vector<8x16xf32>
    %20 = arith.subf %14, %19 : vector<8x16xf32>
    %cst_6 = arith.constant 1.000000e+00 : f32
    %21 = vector.broadcast %cst_6 : f32 to vector<8x1xf32>
    %22 = arith.divf %21, %17 : vector<8x1xf32>
    %23 = vector.broadcast %22 : vector<8x1xf32> to vector<8x16xf32>
    %24 = arith.mulf %15, %23 : vector<8x16xf32>
    %25 = tpu.iota {dimensions = array<i32: 1>} : vector<8x16xi32>
    %26 = vector.broadcast %4 : vector<8x1xi32> to vector<8x16xi32>
    %27 = arith.cmpi eq, %25, %26 : vector<8x16xi32>
    %cst_7 = arith.constant 0.000000e+00 : f32
    %28 = vector.broadcast %cst_7 : f32 to vector<8x16xf32>
    %29 = arith.select %27, %20, %28 : vector<8x16xi1>, vector<8x16xf32>
    %cst_8 = arith.constant dense<0.000000e+00> : vector<8xf32>
    %30 = vector.multi_reduction <add>, %29, %cst_8 [1] : vector<8x16xf32> to vector<8xf32>
    %31 = vector.shape_cast %30 : vector<8xf32> to vector<8x1xf32>
    %cst_9 = arith.constant 0.000000e+00 : f32
    %32 = vector.broadcast %cst_9 : f32 to vector<8x1xf32>
    %33 = arith.subf %32, %31 : vector<8x1xf32>
    %cst_10 = arith.constant dense<0.000000e+00> : vector<8xf32>
    %34 = vector.multi_reduction <add>, %20, %cst_10 [1] : vector<8x16xf32> to vector<8xf32>
    %35 = vector.shape_cast %34 : vector<8xf32> to vector<8x1xf32>
    %cst_11 = arith.constant 0.000000e+00 : f32
    %36 = vector.broadcast %cst_11 : f32 to vector<8x1xf32>
    %37 = arith.subf %36, %35 : vector<8x1xf32>
    %38 = arith.divf %33, %37 : vector<8x1xf32>
    %cst_12 = arith.constant 1.000000e-07 : f32
    %39 = vector.broadcast %cst_12 : f32 to vector<8x16xf32>
    %40 = arith.maximumf %24, %39 : vector<8x16xf32>
    %cst_13 = arith.constant 0.000000e+00 : f32
    %41 = vector.broadcast %cst_13 : f32 to vector<8x16xf32>
    %42 = arith.select %27, %40, %41 : vector<8x16xi1>, vector<8x16xf32>
    %cst_14 = arith.constant dense<0.000000e+00> : vector<8xf32>
    %43 = vector.multi_reduction <add>, %42, %cst_14 [1] : vector<8x16xf32> to vector<8xf32>
    %44 = vector.shape_cast %43 : vector<8xf32> to vector<8x1xf32>
    %cst_15 = arith.constant dense<0.000000e+00> : vector<8xf32>
    %45 = vector.multi_reduction <add>, %40, %cst_15 [1] : vector<8x16xf32> to vector<8xf32>
    %46 = vector.shape_cast %45 : vector<8xf32> to vector<8x1xf32>
    %47 = arith.subf %46, %44 : vector<8x1xf32>
    %cst_16 = arith.constant 9.21034049 : f32
    %48 = vector.broadcast %cst_16 : f32 to vector<8x1xf32>
    %49 = arith.mulf %48, %47 : vector<8x1xf32>
    %cst_17 = arith.constant 1.000000e+00 : f32
    %50 = vector.broadcast %cst_17 : f32 to vector<8x1xf32>
    %51 = arith.mulf %50, %38 : vector<8x1xf32>
    %cst_18 = arith.constant 5.000000e-01 : f32
    %52 = vector.broadcast %cst_18 : f32 to vector<8x1xf32>
    %53 = arith.mulf %52, %49 : vector<8x1xf32>
    %54 = arith.addf %51, %53 : vector<8x1xf32>
    %cst_19 = arith.constant 0.000000e+00 : f32
    %55 = vector.broadcast %cst_19 : f32 to vector<8x1xf32>
    %56 = arith.select %10, %54, %55 : vector<8x1xi1>, vector<8x1xf32>
    %c0_20 = arith.constant 0 : index
    %c0_21 = arith.constant 0 : index
    %57 = vector.load %arg4[%c0_20, %c0_21] : memref<1x1xf32, #tpu.memory_space<vmem>>, vector<1x1xf32>
    %58 = vector.shape_cast %56 : vector<8x1xf32> to vector<1x8x1xf32>
    %cst_22 = arith.constant dense<0.000000e+00> : vector<1xf32>
    %59 = vector.multi_reduction <add>, %58, %cst_22 [1, 2] : vector<1x8x1xf32> to vector<1xf32>
    %60 = vector.shape_cast %59 : vector<1xf32> to vector<1x1x1xf32>
    %61 = vector.extract %60[0, 0, 0] : f32 from vector<1x1x1xf32>
    %62 = vector.broadcast %61 : f32 to vector<1x1xf32>
    %63 = arith.addf %57, %62 : vector<1x1xf32>
    %c0_23 = arith.constant 0 : index
    %c0_24 = arith.constant 0 : index
    %64 = vector.load %arg4[%c0_23, %c0_24] : memref<1x1xf32, #tpu.memory_space<vmem>>, vector<1x1xf32>
    tpu.vector_store %arg4[%c0_23, %c0_24], %63 {strides = array<i32>} : memref<1x1xf32, #tpu.memory_space<vmem>>, vector<1x1xf32>,
    %c0_i32_25 = arith.constant 0 : i32
    %65 = arith.cmpi eq, %arg0, %c0_i32_25 : i32
    %66 = arith.extui %65 : i1 to i32
    %c0_i32_26 = arith.constant 0 : i32
    %67 = arith.cmpi ne, %66, %c0_i32_26 : i32
    scf.if %67 {
      %c0_27 = arith.constant 0 : index
      %c0_28 = arith.constant 0 : index
      %68 = vector.load %arg4[%c0_27, %c0_28] : memref<1x1xf32, #tpu.memory_space<vmem>>, vector<1x1xf32>
      %cst_29 = arith.constant 1.250000e-01 : f32
      %69 = vector.broadcast %cst_29 : f32 to vector<1x1xf32>
      %70 = arith.mulf %68, %69 : vector<1x1xf32>
      %c0_30 = arith.constant 0 : index
      %c0_31 = arith.constant 0 : index
      %71 = vector.load %arg3[%c0_30, %c0_31] : memref<1x1xf32, #tpu.memory_space<vmem>>, vector<1x1xf32>
      tpu.vector_store %arg3[%c0_30, %c0_31], %70 {strides = array<i32>} : memref<1x1xf32, #tpu.memory_space<vmem>>, vector<1x1xf32>,
    } else {
    }
    return
  }
  func.func @transform_0(%arg0: i32) -> (i32, i32) {
    %c0_i32 = arith.constant 0 : i32
    %c0_i32_0 = arith.constant 0 : i32
    return %arg0, %c0_i32 : i32, i32
  }
  func.func @transform_1(%arg0: i32) -> (i32, i32) {
    %c0_i32 = arith.constant 0 : i32
    %c0_i32_0 = arith.constant 0 : i32
    return %arg0, %c0_i32 : i32, i32
  }
  func.func @transform_2(%arg0: i32) -> (i32, i32) {
    %c0_i32 = arith.constant 0 : i32
    %c0_i32_0 = arith.constant 0 : i32
    %c0_i32_1 = arith.constant 0 : i32
    return %c0_i32, %c0_i32_0 : i32, i32
  }
}

</mosaic_0001>

<llo_original>
// kernel: tpu_custom_call.1
$region0: #{tpu_custom_call.1}
  #allocation0 [shape = 'u32[]', space=smem, size = 0x4, offset = 0x4, fixed_abs, tag = 'smem constant byte address 0x4 - core index']
  #allocation1 [shape = 'u32[144,128]{1,0:T(1,128)}', space=vmem, size = 0x12000, scoped, tag = 'internal scratch']
  #allocation2 [shape = 'f32[1,1]{1,0:T(1,128)}', space=vmem, size = 0x200, scoped, tag = 'scratch operand']
  %s0 = inlined_call_operand.vmem [shape: f32[8,16], index: 0, kind: input, shape index: {}]
  %s1 = inlined_call_operand.vmem [shape: s32[8,1], index: 1, kind: input, shape index: {}]
  %s2 = inlined_call_operand.hbm [shape: f32[1,1], index: 2, kind: output, shape index: {}]
  %s3 = sld [smem:[#allocation0]]
  $region26: #{tpu_custom_call.1} parent=0
    _
  %s5 = ssub.s32 1, %s3
  %s6 = scalar_select 0, %s5, %s3
  $region1: #{tpu_custom_call.1} parent=0
    #allocation3 [shape = 'u8[512]{0}', space=vmem, size = 0x400, scoped, tag = 'output window, operand 0, single buffered']
    #allocation4 [shape = 's32[1]{0}', space=sflag, size = 0x4, scoped, tag = 'scoped memory for tpu_custom_call.1']
    %7 = vsyncpa [#allocation4], 0
    // Predicated region
    $region2: #{tpu_custom_call.1} parent=1 // pred_check
      _
    $region3: #{tpu_custom_call.1} parent=1 // pred_check_branch
      %9 = sbr.rel (0) target = $region5
    $region4: #{tpu_custom_call.1} parent=1 // pred_region
      _
    $region5: #{tpu_custom_call.1} parent=1 // pred_fallthru
      _
    // Predicated region
    $region6: #{tpu_custom_call.1} parent=1 // pred_check
      _
    $region7: #{tpu_custom_call.1} parent=1 // pred_check_branch
      %11 = sbr.rel (0) target = $region9
    $region8: #{tpu_custom_call.1} parent=1 // pred_region
      _
    $region9: #{tpu_custom_call.1} parent=1 // pred_fallthru
      _
    %p12 = scmp.eq.s32.totalorder 0, 0
    // Predicated region
    $region10: #{tpu_custom_call.1} parent=1 // pred_check
      %p13 = pneg %p12
    $region11: #{tpu_custom_call.1} parent=1 // pred_check_branch
      %15 = sbr.rel (%p13) target = $region13
    $region12: #{tpu_custom_call.1} parent=1 // pred_region
      %vm16 = vcmask 0
      %17 = vst.msk [vmem:[#allocation2] sm:$0x1] %vm16, 0.0
    $region13: #{tpu_custom_call.1} parent=1 // pred_fallthru
      _
    %v18 = vld [vmem:[%s0] sm:$0xff]
    %v19 = vld [vmem:[%s1] sm:$0xff]
    %s20 = smul.u32 0, 8
    %v21 = vlaneseq
    %v22 = vshrl.u32 %v21, 7
    %v23 = vstv %s20
    %v24 = vadd.s32 %v23, %v22
    %vm25 = vcmp.lt.s32.totalorder %v24, 8
    %vm26 = vcmask 130048
    %v27 = vsel %vm26, %v18, -inf
    %28 = vmax.xlane.f32.xlu0 %v27
    %v29 = vpop.xlane.xlu0 %28
    %v30 = vsub.f32 %v18, %v29
    %v31 = vmul.f32 %v30, 1.442695
    %v32 = vpow.pop %v31
    %v33 = vsel %vm26, %v32, 0.0
    %34 = vadd.xlane.f32.xlu0 %v33
    %v35 = vpop.xlane.xlu0 %34
    %v36 = vlog2.pop %v35
    %v37 = vmul.f32 %v36, 0.6931472
    %v38 = vsub.f32 %v30, %v37
    %v39 = vrcp.pop %v35
    %v40 = vmul.f32 1.0, %v39
    %v41 = vmul.f32 %v32, %v40
    %v42 = vlaneseq
    %v43 = vand.u32 %v42, 127
    %44 = vset.pattern.permute.xlu0 0
    %45 = vperm.xlu0 %44, %v19
    %v46 = vpop.permute.xlu0 %45
    %vm47 = vcmp.eq.s32.totalorder %v43, %v46
    %v48 = vsel %vm47, %v38, 0.0
    %v49 = vsel %vm26, %v48, 0.0
    %50 = vadd.xlane.f32.xlu0 %v49
    %v51 = vpop.xlane.xlu0 %50
    %v52 = vsub.f32 0.0, %v51
    %v53 = vsel %vm26, %v38, 0.0
    %54 = vadd.xlane.f32.xlu0 %v53
    %v55 = vpop.xlane.xlu0 %54
    %v56 = vsub.f32 0.0, %v55
    %v57 = vrcp.pop %v56
    %v58 = vmul.f32 %v52, %v57
    %v59 = vmax.f32 %v41, 1e-07
    %v60 = vsel %vm47, %v59, 0.0
    %v61 = vsel %vm26, %v60, 0.0
    %62 = vadd.xlane.f32.xlu0 %v61
    %v63 = vpop.xlane.xlu0 %62
    %v64 = vsel %vm26, %v59, 0.0
    %65 = vadd.xlane.f32.xlu0 %v64
    %v66 = vpop.xlane.xlu0 %65
    %v67 = vsub.f32 %v66, %v63
    %v68 = vmul.f32 %v67, 9.2103405
    %v69 = vmul.f32 %v68, 0.5
    %v70 = vadd.f32 %v58, %v69
    %v71 = vsel %vm25, %v70, 0.0
    %v72 = vld [vmem:[#allocation2] sm:$0x1]
    %vm73 = vcmask 7168
    %v74 = vsel %vm73, %v71, 0.0
    %75 = vadd.xlane.f32.xlu0 %v74
    %v76 = vpop.xlane.xlu0 %75
    %v77 = vrot.slane %v76, 4
    %v78 = vadd.f32 %v76, %v77
    %v79 = vrot.slane %v78, 2
    %v80 = vadd.f32 %v78, %v79
    %v81 = vrot.slane %v80, 1
    %v82 = vadd.f32 %v80, %v81
    %s83 = vtos %v82
    %v84 = vstv %s83
    %v85 = vadd.f32 %v72, %v84
    %vm86 = vcmask 0
    %87 = vst.msk [vmem:[#allocation2] sm:$0x1] %vm86, %v85
    // Predicated region
    $region14: #{tpu_custom_call.1} parent=1 // pred_check
      %p88 = pneg %p12
    $region15: #{tpu_custom_call.1} parent=1 // pred_check_branch
      %90 = sbr.rel (%p88) target = $region17
    $region16: #{tpu_custom_call.1} parent=1 // pred_region
      %v91 = vld [vmem:[#allocation2] sm:$0x1]
      %v92 = vmul.f32 %v91, 0.125
      %93 = vst.msk [vmem:[#allocation3] sm:$0x1] %vm86, %v92
    $region17: #{tpu_custom_call.1} parent=1 // pred_fallthru
      _
    // Predicated region
    $region18: #{tpu_custom_call.1} parent=1 // pred_check
      _
    $region19: #{tpu_custom_call.1} parent=1 // pred_check_branch
      %95 = sbr.rel (0) target = $region21
    $region20: #{tpu_custom_call.1} parent=1 // pred_region
      %s97 = ssub.s32 16, 16
      %98 = vsyncadd [#allocation4], %s97
      %s100 = sshll.u32 [#allocation3], 4
      %s101 = int_to_ptr.vmem [resolvable:$true] %s100
      %103 = dma.vmem_to_hbm [thread:$0]  %s101, 16, %s2, [#allocation4]
    $region21: #{tpu_custom_call.1} parent=1 // pred_fallthru
      _
    // Predicated region
    $region22: #{tpu_custom_call.1} parent=1 // pred_check
      _
    $region23: #{tpu_custom_call.1} parent=1 // pred_check_branch
      %105 = sbr.rel (0) target = $region25
    $region24: #{tpu_custom_call.1} parent=1 // pred_region
      %106 = dma.done [#allocation4], 16
    $region25: #{tpu_custom_call.1} parent=1 // pred_fallthru
      _
    %107 = vsyncpa [#allocation4], 1

</llo_original>
